<compile_context>
chip_gen: v6e
topology: v6e:2x2x1
jax: 0.10.0
libtpu: 0.0.40
codegen_flags: <defaults>
</compile_context>

<pallas_src>
import functools

import jax
import jax.numpy as jnp
from jax.experimental import pallas as pl
from jax.experimental.pallas import tpu as pltpu


def _round_up(x, m):
    return (x + m - 1) // m * m


def _matmul_bn_act_kernel(lhs_ref, rhs_ref, scale_ref, bias_ref, o_ref, *, apply_relu):
    # lhs_ref:   (tm, K)  im2col patch rows
    # rhs_ref:   (K, Np)  reshaped conv weights (Np = Cout padded to 128)
    # scale_ref: (1, Np)  folded BN scale (gamma / sqrt(var + eps))
    # bias_ref:  (1, Np)  folded BN bias  (beta - mean * scale)
    acc = jnp.dot(lhs_ref[...], rhs_ref[...], preferred_element_type=jnp.float32)
    y = acc * scale_ref[...] + bias_ref[...]
    if apply_relu:
        y = jnp.maximum(y, 0.0)
    o_ref[...] = y.astype(o_ref.dtype)


def conv3x3_s2_bn_act_pallas(x_nchw, weight, gamma, beta, mean, var,
                             eps=1e-5, apply_relu=False, tile_m=512):
    """3x3 stride-2 pad-1 conv (bias=False) + BatchNorm (running stats) + optional ReLU.

    x_nchw: (B, Cin, H, W), weight: (Cout, Cin, 3, 3). Returns (B, Cout, Ho, Wo).
    """
    B, Cin, H, W = x_nchw.shape
    Cout = weight.shape[0]
    Ho = (H + 2 - 3) // 2 + 1
    Wo = (W + 2 - 3) // 2 + 1

    # ---- wrapper-side layout plumbing (im2col); all compute stays in-kernel ----
    x = jnp.transpose(x_nchw, (0, 2, 3, 1))                       # NHWC
    x = jnp.pad(x, ((0, 0), (1, 1), (1, 1), (0, 0)))              # pad=1
    taps = []
    for kh in range(3):
        for kw in range(3):
            taps.append(x[:, kh::2, kw::2, :][:, :Ho, :Wo, :])    # (B, Ho, Wo, Cin)
    patches = jnp.stack(taps, axis=3).reshape(B * Ho * Wo, 9 * Cin)   # (M, K)

    # Weight -> (K, Cout) with the matching (kh, kw, cin) flattening order.
    w = jnp.transpose(weight, (2, 3, 1, 0)).reshape(9 * Cin, Cout)

    # Fold BatchNorm (inference) into per-output-channel scale + bias.
    scale = (gamma / jnp.sqrt(var + eps)).astype(jnp.float32)
    bias = (beta.astype(jnp.float32) - mean.astype(jnp.float32) * scale)

    M, K = patches.shape
    Np = _round_up(Cout, 128)                     # lane-dense output / weights
    tm = tile_m if M >= tile_m else _round_up(M, 8)
    Mp = _round_up(M, tm)

    lhs = jnp.pad(patches, ((0, Mp - M), (0, 0)))
    rhs = jnp.pad(w, ((0, 0), (0, Np - Cout)))
    scale_p = jnp.pad(scale, (0, Np - Cout)).reshape(1, Np)
    bias_p = jnp.pad(bias, (0, Np - Cout)).reshape(1, Np)

    grid = (Mp // tm,)
    kernel = functools.partial(_matmul_bn_act_kernel, apply_relu=apply_relu)

    cost = pl.CostEstimate(
        flops=2 * Mp * K * Np,
        transcendentals=0,
        bytes_accessed=4 * (Mp * K + K * Np + Mp * Np + 2 * Np),
    )

    out = pl.pallas_call(
        kernel,
        out_shape=jax.ShapeDtypeStruct((Mp, Np), x_nchw.dtype),
        grid_spec=pltpu.PrefetchScalarGridSpec(
            num_scalar_prefetch=0,
            grid=grid,
            in_specs=[
                pl.BlockSpec((tm, K), lambda i: (i, 0)),   # im2col rows (tiled over M)
                pl.BlockSpec((K, Np), lambda i: (0, 0)),   # weights (VMEM-resident)
                pl.BlockSpec((1, Np), lambda i: (0, 0)),   # BN scale
                pl.BlockSpec((1, Np), lambda i: (0, 0)),   # BN bias
            ],
            out_specs=pl.BlockSpec((tm, Np), lambda i: (i, 0)),
        ),
        compiler_params=pltpu.CompilerParams(
            dimension_semantics=("parallel",)),
        cost_estimate=cost,
    )(lhs, rhs, scale_p, bias_p)

    out = out[:M, :Cout].reshape(B, Ho, Wo, Cout)
    return jnp.transpose(out, (0, 3, 1, 2))                       # back to NCHW


def patch_embed_smaller_pallas(x, params, eps=1e-5):
    """PatchEmbedSmaller.forward: Conv2dBN -> ReLU -> Conv2dBN (NCHW in/out)."""
    p1, p2 = params["conv1"], params["conv2"]
    y = conv3x3_s2_bn_act_pallas(x, p1["w"], p1["gamma"], p1["beta"],
                                 p1["mean"], p1["var"], eps=eps, apply_relu=True)
    y = conv3x3_s2_bn_act_pallas(y, p2["w"], p2["gamma"], p2["beta"],
                                 p2["mean"], p2["var"], eps=eps, apply_relu=False)
    return y


if __name__ == "__main__":
    key = jax.random.PRNGKey(0)
    ks = jax.random.split(key, 11)

    B, in_chans, H, W = 2, 4, 16, 16
    embed_dim = 32
    mid = embed_dim // 2

    x = jax.random.normal(ks[0], (B, in_chans, H, W), dtype=jnp.float32)

    def bn_params(kg, kb, km, kv, c):
        return dict(
            gamma=1.0 + 0.1 * jax.random.normal(kg, (c,), jnp.float32),
            beta=0.1 * jax.random.normal(kb, (c,), jnp.float32),
            mean=0.1 * jax.random.normal(km, (c,), jnp.float32),
            var=jax.random.uniform(kv, (c,), jnp.float32, 0.5, 1.5),
        )

    params = dict(
        conv1=dict(w=0.2 * jax.random.normal(ks[1], (mid, in_chans, 3, 3), jnp.float32),
                   **bn_params(ks[2], ks[3], ks[4], ks[5], mid)),
        conv2=dict(w=0.1 * jax.random.normal(ks[6], (embed_dim, mid, 3, 3), jnp.float32),
                   **bn_params(ks[7], ks[8], ks[9], ks[10], embed_dim)),
    )

    out = jax.block_until_ready(patch_embed_smaller_pallas(x, params))
    assert out.shape == (B, embed_dim, H // 4, W // 4), out.shape

    # Pure-JAX reference: conv(stride 2, pad 1) + inference BatchNorm (+ ReLU).
    def ref_conv_bn(xr, w, gamma, beta, mean, var, eps=1e-5, relu=False):
        y = jax.lax.conv_general_dilated(
            xr, w, window_strides=(2, 2), padding=((1, 1), (1, 1)),
            dimension_numbers=("NCHW", "OIHW", "NCHW"),
            precision=jax.lax.Precision.HIGHEST)
        s = gamma / jnp.sqrt(var + eps)
        b = beta - mean * s
        y = y * s[None, :, None, None] + b[None, :, None, None]
        return jnp.maximum(y, 0.0) if relu else y

    p1, p2 = params["conv1"], params["conv2"]
    ref = ref_conv_bn(x, p1["w"], p1["gamma"], p1["beta"], p1["mean"], p1["var"], relu=True)
    ref = ref_conv_bn(ref, p2["w"], p2["gamma"], p2["beta"], p2["mean"], p2["var"], relu=False)

    max_err = float(jnp.max(jnp.abs(out - ref)))
    assert jnp.allclose(out, ref, atol=2e-2, rtol=2e-2), f"mismatch, max_err={max_err}"

    print("KERNEL_OK")
</pallas_src>

<mosaic_0001>
module attributes {stable_mosaic.version = 11 : i64} {
  func.func @_matmul_bn_act_kernel(%arg0: i32, %arg1: memref<128x36xf32, #tpu.memory_space<vmem>>, %arg2: memref<36x128xf32, #tpu.memory_space<vmem>>, %arg3: memref<1x128xf32, #tpu.memory_space<vmem>>, %arg4: memref<1x128xf32, #tpu.memory_space<vmem>>, %arg5: memref<128x128xf32, #tpu.memory_space<vmem>>) attributes {dimension_semantics = [#tpu.dimension_semantics<parallel>], iteration_bounds = array<i64: 1>, scalar_prefetch = 0 : i64, scratch_operands = 0 : i64, tpu.core_type = #tpu.core_type<tc>, window_params = [{transform_indices = @transform_0, window_bounds = array<i64: 128, 36>}, {pipeline_mode = #tpu.pipeline_mode<synchronous>, transform_indices = @transform_1, window_bounds = array<i64: 36, 128>}, {pipeline_mode = #tpu.pipeline_mode<synchronous>, transform_indices = @transform_2, window_bounds = array<i64: 1, 128>}, {pipeline_mode = #tpu.pipeline_mode<synchronous>, transform_indices = @transform_3, window_bounds = array<i64: 1, 128>}, {transform_indices = @transform_4, window_bounds = array<i64: 128, 128>}]} {
    %c0 = arith.constant 0 : index
    %c0_0 = arith.constant 0 : index
    %0 = vector.load %arg1[%c0, %c0_0] : memref<128x36xf32, #tpu.memory_space<vmem>>, vector<128x36xf32>
    %c0_1 = arith.constant 0 : index
    %c0_2 = arith.constant 0 : index
    %1 = vector.load %arg2[%c0_1, %c0_2] : memref<36x128xf32, #tpu.memory_space<vmem>>, vector<36x128xf32>
    %cst = arith.constant dense<0.000000e+00> : vector<128x128xf32>
    %2 = tpu.matmul %0, %1, %cst {dimension_numbers = #tpu.dot_dimension_numbers<[1], [0], [0], [1], [0, 0, 1, 1], [], []>} : vector<128x36xf32>, vector<36x128xf32>, vector<128x128xf32> -> vector<128x128xf32>
    %c0_3 = arith.constant 0 : index
    %c0_4 = arith.constant 0 : index
    %3 = vector.load %arg3[%c0_3, %c0_4] : memref<1x128xf32, #tpu.memory_space<vmem>>, vector<1x128xf32>
    %4 = vector.broadcast %3 : vector<1x128xf32> to vector<128x128xf32>
    %5 = arith.mulf %2, %4 : vector<128x128xf32>
    %c0_5 = arith.constant 0 : index
    %c0_6 = arith.constant 0 : index
    %6 = vector.load %arg4[%c0_5, %c0_6] : memref<1x128xf32, #tpu.memory_space<vmem>>, vector<1x128xf32>
    %7 = vector.broadcast %6 : vector<1x128xf32> to vector<128x128xf32>
    %8 = arith.addf %5, %7 : vector<128x128xf32>
    %cst_7 = arith.constant 0.000000e+00 : f32
    %9 = vector.broadcast %cst_7 : f32 to vector<128x128xf32>
    %10 = arith.maximumf %8, %9 : vector<128x128xf32>
    %c0_8 = arith.constant 0 : index
    %c0_9 = arith.constant 0 : index
    %11 = vector.load %arg5[%c0_8, %c0_9] : memref<128x128xf32, #tpu.memory_space<vmem>>, vector<128x128xf32>
    tpu.vector_store %arg5[%c0_8, %c0_9], %10 {strides = array<i32>} : memref<128x128xf32, #tpu.memory_space<vmem>>, vector<128x128xf32>,
    return
  }
  func.func @transform_0(%arg0: i32) -> (i32, i32) {
    %c0_i32 = arith.constant 0 : i32
    %c0_i32_0 = arith.constant 0 : i32
    return %arg0, %c0_i32 : i32, i32
  }
  func.func @transform_1(%arg0: i32) -> (i32, i32) {
    %c0_i32 = arith.constant 0 : i32
    %c0_i32_0 = arith.constant 0 : i32
    %c0_i32_1 = arith.constant 0 : i32
    return %c0_i32, %c0_i32_0 : i32, i32
  }
  func.func @transform_2(%arg0: i32) -> (i32, i32) {
    %c0_i32 = arith.constant 0 : i32
    %c0_i32_0 = arith.constant 0 : i32
    %c0_i32_1 = arith.constant 0 : i32
    return %c0_i32, %c0_i32_0 : i32, i32
  }
  func.func @transform_3(%arg0: i32) -> (i32, i32) {
    %c0_i32 = arith.constant 0 : i32
    %c0_i32_0 = arith.constant 0 : i32
    %c0_i32_1 = arith.constant 0 : i32
    return %c0_i32, %c0_i32_0 : i32, i32
  }
  func.func @transform_4(%arg0: i32) -> (i32, i32) {
    %c0_i32 = arith.constant 0 : i32
    %c0_i32_0 = arith.constant 0 : i32
    return %arg0, %c0_i32 : i32, i32
  }
}

</mosaic_0001>

<llo_original>
// kernel: tpu_custom_call.1
$region0: #{tpu_custom_call.1}
  #allocation0 [shape = 'u32[]', space=smem, size = 0x4, offset = 0x4, fixed_abs, tag = 'smem constant byte address 0x4 - core index']
  #allocation1 [shape = 'u32[144,128]{1,0:T(1,128)}', space=vmem, size = 0x12000, scoped, tag = 'internal scratch']
  %s0 = inlined_call_operand.vmem [shape: f32[128,36], index: 0, kind: input, shape index: {}]
  %s1 = inlined_call_operand.vmem [shape: f32[36,128], index: 1, kind: input, shape index: {}]
  %s2 = inlined_call_operand.vmem [shape: f32[1,128], index: 2, kind: input, shape index: {}]
  %s3 = inlined_call_operand.vmem [shape: f32[1,128], index: 3, kind: input, shape index: {}]
  %s4 = inlined_call_operand.hbm [shape: f32[128,128], index: 4, kind: output, shape index: {}]
  %s5 = sld [smem:[#allocation0]]
  $region26: #{tpu_custom_call.1} parent=0
    _
  %s7 = ssub.s32 1, %s5
  %s8 = scalar_select 0, %s7, %s5
  $region1: #{tpu_custom_call.1} parent=0
    #allocation2 [shape = 'u8[65536]{0}', space=vmem, size = 0x10000, scoped, tag = 'output window, operand 0, single buffered']
    #allocation3 [shape = 's32[1]{0}', space=sflag, size = 0x4, scoped, tag = 'scoped memory for tpu_custom_call.1']
    %9 = vsyncpa [#allocation3], 0
    // Predicated region
    $region2: #{tpu_custom_call.1} parent=1 // pred_check
      _
    $region3: #{tpu_custom_call.1} parent=1 // pred_check_branch
      %11 = sbr.rel (0) target = $region5
    $region4: #{tpu_custom_call.1} parent=1 // pred_region
      _
    $region5: #{tpu_custom_call.1} parent=1 // pred_fallthru
      _
    // Predicated region
    $region6: #{tpu_custom_call.1} parent=1 // pred_check
      _
    $region7: #{tpu_custom_call.1} parent=1 // pred_check_branch
      %13 = sbr.rel (0) target = $region9
    $region8: #{tpu_custom_call.1} parent=1 // pred_region
      _
    $region9: #{tpu_custom_call.1} parent=1 // pred_fallthru
      _
    // Predicated region
    $region10: #{tpu_custom_call.1} parent=1 // pred_check
      _
    $region11: #{tpu_custom_call.1} parent=1 // pred_check_branch
      %15 = sbr.rel (0) target = $region13
    $region12: #{tpu_custom_call.1} parent=1 // pred_region
      _
    $region13: #{tpu_custom_call.1} parent=1 // pred_fallthru
      _
    // Predicated region
    $region14: #{tpu_custom_call.1} parent=1 // pred_check
      _
    $region15: #{tpu_custom_call.1} parent=1 // pred_check_branch
      %17 = sbr.rel (0) target = $region17
    $region16: #{tpu_custom_call.1} parent=1 // pred_region
      _
    $region17: #{tpu_custom_call.1} parent=1 // pred_fallthru
      _
    %v18 = vld [vmem:[%s0] sm:$0xff]
    %v19 = vld [vmem:[%s0 + $0x8] sm:$0xff]
    %v20 = vld [vmem:[%s0 + $0x10] sm:$0xff]
    %v21 = vld [vmem:[%s0 + $0x18] sm:$0xff]
    %v22 = vld [vmem:[%s0 + $0x20] sm:$0xff]
    %v23 = vld [vmem:[%s0 + $0x28] sm:$0xff]
    %v24 = vld [vmem:[%s0 + $0x30] sm:$0xff]
    %v25 = vld [vmem:[%s0 + $0x38] sm:$0xff]
    %v26 = vld [vmem:[%s0 + $0x40] sm:$0xff]
    %v27 = vld [vmem:[%s0 + $0x48] sm:$0xff]
    %v28 = vld [vmem:[%s0 + $0x50] sm:$0xff]
    %v29 = vld [vmem:[%s0 + $0x58] sm:$0xff]
    %v30 = vld [vmem:[%s0 + $0x60] sm:$0xff]
    %v31 = vld [vmem:[%s0 + $0x68] sm:$0xff]
    %v32 = vld [vmem:[%s0 + $0x70] sm:$0xff]
    %v33 = vld [vmem:[%s0 + $0x78] sm:$0xff]
    %v34 = vld [vmem:[%s1] sm:$0xff]
    %v35 = vld [vmem:[%s1 + $0x8] sm:$0xff]
    %v36 = vld [vmem:[%s1 + $0x10] sm:$0xff]
    %v37 = vld [vmem:[%s1 + $0x18] sm:$0xff]
    %v38 = vld [vmem:[%s1 + $0x20] sm:$0xf]
    %vm39 = vcmask 293888
    %v41 = vsel %vm39, %v18, 0
    %v44 = vsel %vm39, %v19, 0
    %v47 = vsel %vm39, %v20, 0
    %v50 = vsel %vm39, %v21, 0
    %v53 = vsel %vm39, %v22, 0
    %v56 = vsel %vm39, %v23, 0
    %v59 = vsel %vm39, %v24, 0
    %v62 = vsel %vm39, %v25, 0
    %v65 = vsel %vm39, %v26, 0
    %v68 = vsel %vm39, %v27, 0
    %v71 = vsel %vm39, %v28, 0
    %v74 = vsel %vm39, %v29, 0
    %v77 = vsel %vm39, %v30, 0
    %v80 = vsel %vm39, %v31, 0
    %v83 = vsel %vm39, %v32, 0
    %v86 = vsel %vm39, %v33, 0
    %vm88 = vcmask 1043456
    %v90 = vsel %vm88, %v38, 0
    %92 = vmatprep.subr.mxu0 0.0
    %93 = vmatpush1.msra.mxu0 0.0
    %94 = vmatprep.subr.mxu0 0.0
    %95 = vmatpush1.msra.mxu0 0.0
    %96 = vmatprep.subr.mxu0 0.0
    %97 = vmatpush1.msra.mxu0 0.0
    %98 = vmatprep.subr.mxu0 0.0
    %99 = vmatpush1.msra.mxu0 0.0
    %100 = vmatprep.subr.mxu0 0.0
    %101 = vmatpush1.msra.mxu0 0.0
    %102 = vmatprep.subr.mxu0 0.0
    %103 = vmatpush1.msra.mxu0 0.0
    %104 = vmatprep.subr.mxu0 0.0
    %105 = vmatpush1.msra.mxu0 0.0
    %106 = vmatprep.subr.mxu0 0.0
    %107 = vmatpush1.msra.mxu0 0.0
    %108 = vmatprep.subr.mxu0 0.0
    %109 = vmatpush1.msra.mxu0 0.0
    %110 = vmatprep.subr.mxu0 0.0
    %111 = vmatpush1.msra.mxu0 0.0
    %112 = vmatprep.subr.mxu0 0.0
    %113 = vmatpush1.msra.mxu0 0.0
    %114 = vmatprep.subr.mxu0 0.0
    %115 = vmatpush1.msra.mxu0 %v90
    %116 = vmatprep.subr.mxu0 0.0
    %117 = vmatpush1.msra.mxu0 %v37
    %118 = vmatprep.subr.mxu0 0.0
    %119 = vmatpush1.msra.mxu0 %v36
    %120 = vmatprep.subr.mxu0 0.0
    %121 = vmatpush1.msra.mxu0 %v35
    %122 = vmatprep.subr.mxu0 0.0
    %123 = vmatpush1.msra.mxu0 %v34
    %124 = vmatprep.subr.mxu0 0.0
    %125 = vmatpush2.msra.mxu0 0.0
    %126 = vmatprep.subr.mxu0 0.0
    %127 = vmatpush2.msra.mxu0 0.0
    %128 = vmatprep.subr.mxu0 0.0
    %129 = vmatpush2.msra.mxu0 0.0
    %130 = vmatprep.subr.mxu0 0.0
    %131 = vmatpush2.msra.mxu0 0.0
    %132 = vmatprep.subr.mxu0 0.0
    %133 = vmatpush2.msra.mxu0 0.0
    %134 = vmatprep.subr.mxu0 0.0
    %135 = vmatpush2.msra.mxu0 0.0
    %136 = vmatprep.subr.mxu0 0.0
    %137 = vmatpush2.msra.mxu0 0.0
    %138 = vmatprep.subr.mxu0 0.0
    %139 = vmatpush2.msra.mxu0 0.0
    %140 = vmatprep.subr.mxu0 0.0
    %141 = vmatpush2.msra.mxu0 0.0
    %142 = vmatprep.subr.mxu0 0.0
    %143 = vmatpush2.msra.mxu0 0.0
    %144 = vmatprep.subr.mxu0 0.0
    %145 = vmatpush2.msra.mxu0 0.0
    %146 = vmatprep.subr.mxu0 0.0
    %147 = vmatpush2.msra.mxu0 0.0
    %148 = vmatprep.subr.mxu0 0.0
    %149 = vmatpush2.msra.mxu0 0.0
    %150 = vmatprep.subr.mxu0 0.0
    %151 = vmatpush2.msra.mxu0 0.0
    %152 = vmatprep.subr.mxu0 0.0
    %153 = vmatpush2.msra.mxu0 0.0
    %154 = vmatprep.subr.mxu0 0.0
    %155 = vmatpush2.msra.mxu0 0.0
    %156 = vmatprep.mubr.f32.mxu0 0.0
    %157 = vmatmul.mubr.f32.gmra.mxu0 %v41
    %v158 = vpop.f32.mrf.mxu0
    %v159 = vadd.f32 0.0, %v158
    %v160 = vpop.f32.mrf.mxu0
    %161 = vmatprep.mubr.f32.mxu0 0.0
    %162 = vmatmul.mubr.f32.gmra.mxu0 %v44
    %v163 = vpop.f32.mrf.mxu0
    %v164 = vadd.f32 0.0, %v163
    %v165 = vpop.f32.mrf.mxu0
    %166 = vmatprep.mubr.f32.mxu0 0.0
    %167 = vmatmul.mubr.f32.gmra.mxu0 %v47
    %v168 = vpop.f32.mrf.mxu0
    %v169 = vadd.f32 0.0, %v168
    %v170 = vpop.f32.mrf.mxu0
    %171 = vmatprep.mubr.f32.mxu0 0.0
    %172 = vmatmul.mubr.f32.gmra.mxu0 %v50
    %v173 = vpop.f32.mrf.mxu0
    %v174 = vadd.f32 0.0, %v173
    %v175 = vpop.f32.mrf.mxu0
    %176 = vmatprep.mubr.f32.mxu0 0.0
    %177 = vmatmul.mubr.f32.gmra.mxu0 %v53
    %v178 = vpop.f32.mrf.mxu0
    %v179 = vadd.f32 0.0, %v178
    %v180 = vpop.f32.mrf.mxu0
    %181 = vmatprep.mubr.f32.mxu0 0.0
    %182 = vmatmul.mubr.f32.gmra.mxu0 %v56
    %v183 = vpop.f32.mrf.mxu0
    %v184 = vadd.f32 0.0, %v183
    %v185 = vpop.f32.mrf.mxu0
    %186 = vmatprep.mubr.f32.mxu0 0.0
    %187 = vmatmul.mubr.f32.gmra.mxu0 %v59
    %v188 = vpop.f32.mrf.mxu0
    %v189 = vadd.f32 0.0, %v188
    %v190 = vpop.f32.mrf.mxu0
    %191 = vmatprep.mubr.f32.mxu0 0.0
    %192 = vmatmul.mubr.f32.gmra.mxu0 %v62
    %v193 = vpop.f32.mrf.mxu0
    %v194 = vadd.f32 0.0, %v193
    %v195 = vpop.f32.mrf.mxu0
    %196 = vmatprep.mubr.f32.mxu0 0.0
    %197 = vmatmul.mubr.f32.gmra.mxu0 %v65
    %v198 = vpop.f32.mrf.mxu0
    %v199 = vadd.f32 0.0, %v198
    %v200 = vpop.f32.mrf.mxu0
    %201 = vmatprep.mubr.f32.mxu0 0.0
    %202 = vmatmul.mubr.f32.gmra.mxu0 %v68
    %v203 = vpop.f32.mrf.mxu0
    %v204 = vadd.f32 0.0, %v203
    %v205 = vpop.f32.mrf.mxu0
    %206 = vmatprep.mubr.f32.mxu0 0.0
    %207 = vmatmul.mubr.f32.gmra.mxu0 %v71
    %v208 = vpop.f32.mrf.mxu0
    %v209 = vadd.f32 0.0, %v208
    %v210 = vpop.f32.mrf.mxu0
    %211 = vmatprep.mubr.f32.mxu0 0.0
    %212 = vmatmul.mubr.f32.gmra.mxu0 %v74
    %v213 = vpop.f32.mrf.mxu0
    %v214 = vadd.f32 0.0, %v213
    %v215 = vpop.f32.mrf.mxu0
    %216 = vmatprep.mubr.f32.mxu0 0.0
    %217 = vmatmul.mubr.f32.gmra.mxu0 %v77
    %v218 = vpop.f32.mrf.mxu0
    %v219 = vadd.f32 0.0, %v218
    %v220 = vpop.f32.mrf.mxu0
    %221 = vmatprep.mubr.f32.mxu0 0.0
    %222 = vmatmul.mubr.f32.gmra.mxu0 %v80
    %v223 = vpop.f32.mrf.mxu0
    %v224 = vadd.f32 0.0, %v223
    %v225 = vpop.f32.mrf.mxu0
    %226 = vmatprep.mubr.f32.mxu0 0.0
    %227 = vmatmul.mubr.f32.gmra.mxu0 %v83
    %v228 = vpop.f32.mrf.mxu0
    %v229 = vadd.f32 0.0, %v228
    %v230 = vpop.f32.mrf.mxu0
    %231 = vmatprep.mubr.f32.mxu0 0.0
    %232 = vmatmul.mubr.f32.gmra.mxu0 %v86
    %v233 = vpop.f32.mrf.mxu0
    %v234 = vadd.f32 0.0, %v233
    %v235 = vpop.f32.mrf.mxu0
    %236 = vdwg.mxu0
    %v237 = vld [vmem:[%s2] sm:$0x1]
    %v239 = vlaneseq
    %v240 = vshrl.u32 %v239, 7
    %v241 = vsub.s32 0, %v240
    %v242 = vrot.slane %v237, %v241
    %v244 = vmul.f32 %v159, %v242
    %v245 = vmul.f32 %v164, %v242
    %v246 = vmul.f32 %v169, %v242
    %v247 = vmul.f32 %v174, %v242
    %v248 = vmul.f32 %v179, %v242
    %v249 = vmul.f32 %v184, %v242
    %v250 = vmul.f32 %v189, %v242
    %v251 = vmul.f32 %v194, %v242
    %v252 = vmul.f32 %v199, %v242
    %v253 = vmul.f32 %v204, %v242
    %v254 = vmul.f32 %v209, %v242
    %v255 = vmul.f32 %v214, %v242
    %v256 = vmul.f32 %v219, %v242
    %v257 = vmul.f32 %v224, %v242
    %v258 = vmul.f32 %v229, %v242
    %v259 = vmul.f32 %v234, %v242
    %v260 = vld [vmem:[%s3] sm:$0x1]
    %v262 = vlaneseq
    %v263 = vshrl.u32 %v262, 7
    %v264 = vsub.s32 0, %v263
    %v265 = vrot.slane %v260, %v264
    %v267 = vadd.f32 %v244, %v265
    %v268 = vadd.f32 %v245, %v265
    %v269 = vadd.f32 %v246, %v265
    %v270 = vadd.f32 %v247, %v265
    %v271 = vadd.f32 %v248, %v265
    %v272 = vadd.f32 %v249, %v265
    %v273 = vadd.f32 %v250, %v265
    %v274 = vadd.f32 %v251, %v265
    %v275 = vadd.f32 %v252, %v265
    %v276 = vadd.f32 %v253, %v265
    %v277 = vadd.f32 %v254, %v265
    %v278 = vadd.f32 %v255, %v265
    %v279 = vadd.f32 %v256, %v265
    %v280 = vadd.f32 %v257, %v265
    %v281 = vadd.f32 %v258, %v265
    %v282 = vadd.f32 %v259, %v265
    %v283 = vmax.f32 %v267, 0.0
    %v284 = vmax.f32 %v268, 0.0
    %v285 = vmax.f32 %v269, 0.0
    %v286 = vmax.f32 %v270, 0.0
    %v287 = vmax.f32 %v271, 0.0
    %v288 = vmax.f32 %v272, 0.0
    %v289 = vmax.f32 %v273, 0.0
    %v290 = vmax.f32 %v274, 0.0
    %v291 = vmax.f32 %v275, 0.0
    %v292 = vmax.f32 %v276, 0.0
    %v293 = vmax.f32 %v277, 0.0
    %v294 = vmax.f32 %v278, 0.0
    %v295 = vmax.f32 %v279, 0.0
    %v296 = vmax.f32 %v280, 0.0
    %v297 = vmax.f32 %v281, 0.0
    %v298 = vmax.f32 %v282, 0.0
    %299 = vst [vmem:[#allocation2] sm:$0xff] %v283
    %300 = vst [vmem:[#allocation2 + $0x8] sm:$0xff] %v284
    %301 = vst [vmem:[#allocation2 + $0x10] sm:$0xff] %v285
    %302 = vst [vmem:[#allocation2 + $0x18] sm:$0xff] %v286
    %303 = vst [vmem:[#allocation2 + $0x20] sm:$0xff] %v287
    %304 = vst [vmem:[#allocation2 + $0x28] sm:$0xff] %v288
    %305 = vst [vmem:[#allocation2 + $0x30] sm:$0xff] %v289
    %306 = vst [vmem:[#allocation2 + $0x38] sm:$0xff] %v290
    %307 = vst [vmem:[#allocation2 + $0x40] sm:$0xff] %v291
    %308 = vst [vmem:[#allocation2 + $0x48] sm:$0xff] %v292
    %309 = vst [vmem:[#allocation2 + $0x50] sm:$0xff] %v293
    %310 = vst [vmem:[#allocation2 + $0x58] sm:$0xff] %v294
    %311 = vst [vmem:[#allocation2 + $0x60] sm:$0xff] %v295
    %312 = vst [vmem:[#allocation2 + $0x68] sm:$0xff] %v296
    %313 = vst [vmem:[#allocation2 + $0x70] sm:$0xff] %v297
    %314 = vst [vmem:[#allocation2 + $0x78] sm:$0xff] %v298
    // Predicated region
    $region18: #{tpu_custom_call.1} parent=1 // pred_check
      _
    $region19: #{tpu_custom_call.1} parent=1 // pred_check_branch
      %316 = sbr.rel (0) target = $region21
    $region20: #{tpu_custom_call.1} parent=1 // pred_region
      %s318 = ssub.s32 2048, 2048
      %319 = vsyncadd [#allocation3], %s318
      %s320 = sshll.u32 [#allocation2], 4
      %s321 = int_to_ptr.vmem [resolvable:$true] %s320
      %326 = dma.vmem_to_hbm [thread:$0]  %s321, 2048, %s4, [#allocation3], 128, 128, 8
    $region21: #{tpu_custom_call.1} parent=1 // pred_fallthru
      _
    // Predicated region
    $region22: #{tpu_custom_call.1} parent=1 // pred_check
      _
    $region23: #{tpu_custom_call.1} parent=1 // pred_check_branch
      %328 = sbr.rel (0) target = $region25
    $region24: #{tpu_custom_call.1} parent=1 // pred_region
      %329 = dma.done [#allocation3], 2048
    $region25: #{tpu_custom_call.1} parent=1 // pred_fallthru
      _
    %330 = vsyncpa [#allocation3], 1

</llo_original>
